<compile_context>
chip_gen: v6e
topology: v6e:2x2x1
jax: 0.10.0
libtpu: 0.0.40
codegen_flags: <defaults>
</compile_context>

<pallas_src>
import functools

import jax
import jax.numpy as jnp
from jax.experimental import pallas as pl
from jax.experimental.pallas import tpu as pltpu


def _round_up(x: int, m: int) -> int:
    return ((x + m - 1) // m) * m


def mlp_kernel(x_ref, w1_ref, b1_ref, w2_ref, b2_ref, w3_ref, b3_ref, o_ref):
    # fc1: Linear (bf16 x bf16 -> f32 acc) + bias + ReLU in f32.
    x = x_ref[...].astype(jnp.bfloat16)
    h1 = jnp.dot(x, w1_ref[...], preferred_element_type=jnp.float32)
    h1 = jnp.maximum(h1 + b1_ref[...], 0.0)
    # fc2: Linear + bias + ReLU (bf16 MXU inputs, f32 accumulation).
    h2 = jnp.dot(h1.astype(jnp.bfloat16), w2_ref[...],
                 preferred_element_type=jnp.float32)
    h2 = jnp.maximum(h2 + b2_ref[...], 0.0)
    # fc3: Linear, no activation.  Output is stored at its true (narrow) width
    # so the HBM writeback is 64 B/row of real data, not 512 B of padded lanes.
    out = jnp.dot(h2.astype(jnp.bfloat16), w3_ref[...],
                  preferred_element_type=jnp.float32)
    o_ref[...] = (out + b3_ref[...]).astype(o_ref.dtype)


@functools.partial(jax.jit, static_argnames=("tb",))
def neural_net_forward(x, w1, b1, w2, b2, w3, b3, *, tb=4096):
    batch, input_num = x.shape
    h1n = w1.shape[1]
    h2n = w2.shape[1]
    out_num = w3.shape[1]

    # ---- lane-dense hidden dims: zero-pad h1/h2 widths to multiples of 128.
    # ReLU(x @ [w|0] + [b|0]) has exact zeros in the pad columns and the padded
    # rows of the next weight are zero, so the math is bit-identical.
    h1p = _round_up(h1n, 128)
    h2p = _round_up(h2n, 128)
    if h1p != h1n:
        w1 = jnp.pad(w1, ((0, 0), (0, h1p - h1n)))
        b1 = jnp.pad(b1, ((0, 0), (0, h1p - h1n)))
        w2 = jnp.pad(w2, ((0, h1p - h1n), (0, 0)))
    if h2p != h2n:
        w2 = jnp.pad(w2, ((0, 0), (0, h2p - h2n)))
        b2 = jnp.pad(b2, ((0, 0), (0, h2p - h2n)))
        w3 = jnp.pad(w3, ((0, h2p - h2n), (0, 0)))

    # ---- batch tiling: multiple of 16; keep >= 2 grid steps when the batch
    # allows so v7x's two TensorCores each stream half under "parallel".
    tb = max(16, _round_up(tb, 16))
    tb_eff = min(tb, _round_up(batch, 16))
    if _round_up(batch, 16) <= tb_eff and batch >= 32:
        tb_eff = _round_up((batch + 1) // 2, 16)
    padded_batch = _round_up(batch, tb_eff)
    if padded_batch != batch:
        x = jnp.pad(x, ((0, padded_batch - batch), (0, 0)))

    # ---- bf16 weights for the MXU; biases stay f32 (f32 epilogues). ----
    w1b = w1.astype(jnp.bfloat16)
    w2b = w2.astype(jnp.bfloat16)
    w3b = w3.astype(jnp.bfloat16)

    grid = (padded_batch // tb_eff,)

    # ---- VMEM budget matched to actual use (not the v7x 64 MiB ceiling). ----
    lane = lambda n: _round_up(n, 128)          # VMEM buffers are lane-padded
    io_bytes = 2 * tb_eff * (lane(input_num) + lane(out_num)) * 4   # x/out, dbl-buffered
    wgt_bytes = 2 * ((input_num * h1p + h1p * h2p + h2p * lane(out_num)) * 2
                     + (h1p + h2p + lane(out_num)) * 4)
    tmp_bytes = tb_eff * ((h1p + h2p) * 6 + lane(out_num) * 4)       # f32+bf16 h1/h2, f32 out
    vmem_limit = int(min(40 << 20,
                         max(16 << 20, 1.25 * (io_bytes + wgt_bytes + tmp_bytes))))

    flops = 2 * batch * (input_num * h1n + h1n * h2n + h2n * out_num)
    bytes_accessed = (
        batch * input_num * 4                               # x (f32) read
        + batch * out_num * 4                               # out (f32) write, unpadded
        + (input_num * h1p + h1p * h2p + h2p * out_num) * 2  # weights (bf16)
        + (h1p + h2p + out_num) * 4)                        # biases (f32)

    resident = lambda a: pl.BlockSpec(a.shape, lambda i: (0, 0))

    out = pl.pallas_call(
        mlp_kernel,
        out_shape=jax.ShapeDtypeStruct((padded_batch, out_num), jnp.float32),
        grid=grid,
        in_specs=[
            pl.BlockSpec((tb_eff, input_num), lambda i: (i, 0)),  # x: batch-tiled
            resident(w1b), resident(b1),
            resident(w2b), resident(b2),
            resident(w3b), resident(b3),
        ],
        out_specs=pl.BlockSpec((tb_eff, out_num), lambda i: (i, 0)),
        compiler_params=pltpu.CompilerParams(
            dimension_semantics=("parallel",),
            vmem_limit_bytes=vmem_limit,
        ),
        cost_estimate=pl.CostEstimate(
            flops=flops, transcendentals=0, bytes_accessed=bytes_accessed),
    )(x, w1b, b1, w2b, b2, w3b, b3)

    return out[:batch]


def init_params(key, input_num, hidden1_num, hidden2_num, output_num):
    """Deterministic init mirroring nn.Linear's U(-1/sqrt(fan_in), 1/sqrt(fan_in))."""
    ks = jax.random.split(key, 6)

    def linear(kw, kb, fan_in, fan_out):
        bound = 1.0 / jnp.sqrt(fan_in)
        w = jax.random.uniform(kw, (fan_in, fan_out), jnp.float32, -bound, bound)
        b = jax.random.uniform(kb, (1, fan_out), jnp.float32, -bound, bound)
        return w, b

    w1, b1 = linear(ks[0], ks[1], input_num, hidden1_num)
    w2, b2 = linear(ks[2], ks[3], hidden1_num, hidden2_num)
    w3, b3 = linear(ks[4], ks[5], hidden2_num, output_num)
    return w1, b1, w2, b2, w3, b3


if __name__ == "__main__":
    # Small shapes consistent with the module's forward.
    batch, input_num, hidden1_num, hidden2_num, output_num = 8, 32, 64, 64, 16

    key = jax.random.PRNGKey(0)
    kx, kp = jax.random.split(key)
    x = jax.random.normal(kx, (batch, input_num), jnp.float32)
    params = init_params(kp, input_num, hidden1_num, hidden2_num, output_num)

    out = neural_net_forward(x, *params)
    jax.block_until_ready(out)
    assert out.shape == (batch, output_num)

    # Reference with the same bf16-input / f32-accumulation numerics.
    w1, b1, w2, b2, w3, b3 = params
    bf = jnp.bfloat16
    ref = jnp.maximum(
        jnp.dot(x.astype(bf), w1.astype(bf), preferred_element_type=jnp.float32) + b1, 0.0)
    ref = jnp.maximum(
        jnp.dot(ref.astype(bf), w2.astype(bf), preferred_element_type=jnp.float32) + b2, 0.0)
    ref = jnp.dot(ref.astype(bf), w3.astype(bf), preferred_element_type=jnp.float32) + b3
    assert jnp.allclose(out, ref, atol=2e-3, rtol=2e-3)

    # Pure-f32 reference sanity check (looser tolerance for bf16 matmul inputs).
    ref32 = jnp.maximum(x @ w1 + b1, 0.0)
    ref32 = jnp.maximum(ref32 @ w2 + b2, 0.0)
    ref32 = ref32 @ w3 + b3
    assert jnp.allclose(out, ref32, atol=5e-2, rtol=5e-2)

    print("KERNEL_OK")
</pallas_src>

<mosaic_0001>
module attributes {stable_mosaic.version = 11 : i64} {
  func.func @mlp_kernel(%arg0: i32, %arg1: memref<16x32xf32, #tpu.memory_space<vmem>>, %arg2: memref<32x128xbf16, #tpu.memory_space<vmem>>, %arg3: memref<1x128xf32, #tpu.memory_space<vmem>>, %arg4: memref<128x128xbf16, #tpu.memory_space<vmem>>, %arg5: memref<1x128xf32, #tpu.memory_space<vmem>>, %arg6: memref<128x16xbf16, #tpu.memory_space<vmem>>, %arg7: memref<1x16xf32, #tpu.memory_space<vmem>>, %arg8: memref<16x16xf32, #tpu.memory_space<vmem>>) attributes {dimension_semantics = [#tpu.dimension_semantics<parallel>], iteration_bounds = array<i64: 1>, scalar_prefetch = 0 : i64, scratch_operands = 0 : i64, tpu.core_type = #tpu.core_type<tc>, window_params = [{transform_indices = @transform_0, window_bounds = array<i64: 16, 32>}, {pipeline_mode = #tpu.pipeline_mode<synchronous>, transform_indices = @transform_1, window_bounds = array<i64: 32, 128>}, {pipeline_mode = #tpu.pipeline_mode<synchronous>, transform_indices = @transform_2, window_bounds = array<i64: 1, 128>}, {pipeline_mode = #tpu.pipeline_mode<synchronous>, transform_indices = @transform_3, window_bounds = array<i64: 128, 128>}, {pipeline_mode = #tpu.pipeline_mode<synchronous>, transform_indices = @transform_4, window_bounds = array<i64: 1, 128>}, {pipeline_mode = #tpu.pipeline_mode<synchronous>, transform_indices = @transform_5, window_bounds = array<i64: 128, 16>}, {pipeline_mode = #tpu.pipeline_mode<synchronous>, transform_indices = @transform_6, window_bounds = array<i64: 1, 16>}, {transform_indices = @transform_7, window_bounds = array<i64: 16, 16>}]} {
    %c0 = arith.constant 0 : index
    %c0_0 = arith.constant 0 : index
    %0 = vector.load %arg1[%c0, %c0_0] : memref<16x32xf32, #tpu.memory_space<vmem>>, vector<16x32xf32>
    %1 = arith.truncf %0 : vector<16x32xf32> to vector<16x32xbf16>
    %c0_1 = arith.constant 0 : index
    %c0_2 = arith.constant 0 : index
    %2 = vector.load %arg2[%c0_1, %c0_2] : memref<32x128xbf16, #tpu.memory_space<vmem>>, vector<32x128xbf16>
    %cst = arith.constant dense<0.000000e+00> : vector<16x128xf32>
    %3 = tpu.matmul %1, %2, %cst {dimension_numbers = #tpu.dot_dimension_numbers<[1], [0], [0], [1], [0, 0, 1, 1], [], []>} : vector<16x32xbf16>, vector<32x128xbf16>, vector<16x128xf32> -> vector<16x128xf32>
    %c0_3 = arith.constant 0 : index
    %c0_4 = arith.constant 0 : index
    %4 = vector.load %arg3[%c0_3, %c0_4] : memref<1x128xf32, #tpu.memory_space<vmem>>, vector<1x128xf32>
    %5 = vector.broadcast %4 : vector<1x128xf32> to vector<16x128xf32>
    %6 = arith.addf %3, %5 : vector<16x128xf32>
    %cst_5 = arith.constant 0.000000e+00 : f32
    %7 = vector.broadcast %cst_5 : f32 to vector<16x128xf32>
    %8 = arith.maximumf %6, %7 : vector<16x128xf32>
    %9 = arith.truncf %8 : vector<16x128xf32> to vector<16x128xbf16>
    %c0_6 = arith.constant 0 : index
    %c0_7 = arith.constant 0 : index
    %10 = vector.load %arg4[%c0_6, %c0_7] : memref<128x128xbf16, #tpu.memory_space<vmem>>, vector<128x128xbf16>
    %cst_8 = arith.constant dense<0.000000e+00> : vector<16x128xf32>
    %11 = tpu.matmul %9, %10, %cst_8 {dimension_numbers = #tpu.dot_dimension_numbers<[1], [0], [0], [1], [0, 0, 1, 1], [], []>} : vector<16x128xbf16>, vector<128x128xbf16>, vector<16x128xf32> -> vector<16x128xf32>
    %c0_9 = arith.constant 0 : index
    %c0_10 = arith.constant 0 : index
    %12 = vector.load %arg5[%c0_9, %c0_10] : memref<1x128xf32, #tpu.memory_space<vmem>>, vector<1x128xf32>
    %13 = vector.broadcast %12 : vector<1x128xf32> to vector<16x128xf32>
    %14 = arith.addf %11, %13 : vector<16x128xf32>
    %cst_11 = arith.constant 0.000000e+00 : f32
    %15 = vector.broadcast %cst_11 : f32 to vector<16x128xf32>
    %16 = arith.maximumf %14, %15 : vector<16x128xf32>
    %17 = arith.truncf %16 : vector<16x128xf32> to vector<16x128xbf16>
    %c0_12 = arith.constant 0 : index
    %c0_13 = arith.constant 0 : index
    %18 = vector.load %arg6[%c0_12, %c0_13] : memref<128x16xbf16, #tpu.memory_space<vmem>>, vector<128x16xbf16>
    %cst_14 = arith.constant dense<0.000000e+00> : vector<16x16xf32>
    %19 = tpu.matmul %17, %18, %cst_14 {dimension_numbers = #tpu.dot_dimension_numbers<[1], [0], [0], [1], [0, 0, 1, 1], [], []>} : vector<16x128xbf16>, vector<128x16xbf16>, vector<16x16xf32> -> vector<16x16xf32>
    %c0_15 = arith.constant 0 : index
    %c0_16 = arith.constant 0 : index
    %20 = vector.load %arg7[%c0_15, %c0_16] : memref<1x16xf32, #tpu.memory_space<vmem>>, vector<1x16xf32>
    %21 = vector.broadcast %20 : vector<1x16xf32> to vector<16x16xf32>
    %22 = arith.addf %19, %21 : vector<16x16xf32>
    %c0_17 = arith.constant 0 : index
    %c0_18 = arith.constant 0 : index
    %23 = vector.load %arg8[%c0_17, %c0_18] : memref<16x16xf32, #tpu.memory_space<vmem>>, vector<16x16xf32>
    tpu.vector_store %arg8[%c0_17, %c0_18], %22 {strides = array<i32>} : memref<16x16xf32, #tpu.memory_space<vmem>>, vector<16x16xf32>,
    return
  }
  func.func @transform_0(%arg0: i32) -> (i32, i32) {
    %c0_i32 = arith.constant 0 : i32
    %c0_i32_0 = arith.constant 0 : i32
    return %arg0, %c0_i32 : i32, i32
  }
  func.func @transform_1(%arg0: i32) -> (i32, i32) {
    %c0_i32 = arith.constant 0 : i32
    %c0_i32_0 = arith.constant 0 : i32
    %c0_i32_1 = arith.constant 0 : i32
    return %c0_i32, %c0_i32_0 : i32, i32
  }
  func.func @transform_2(%arg0: i32) -> (i32, i32) {
    %c0_i32 = arith.constant 0 : i32
    %c0_i32_0 = arith.constant 0 : i32
    %c0_i32_1 = arith.constant 0 : i32
    return %c0_i32, %c0_i32_0 : i32, i32
  }
  func.func @transform_3(%arg0: i32) -> (i32, i32) {
    %c0_i32 = arith.constant 0 : i32
    %c0_i32_0 = arith.constant 0 : i32
    %c0_i32_1 = arith.constant 0 : i32
    return %c0_i32, %c0_i32_0 : i32, i32
  }
  func.func @transform_4(%arg0: i32) -> (i32, i32) {
    %c0_i32 = arith.constant 0 : i32
    %c0_i32_0 = arith.constant 0 : i32
    %c0_i32_1 = arith.constant 0 : i32
    return %c0_i32, %c0_i32_0 : i32, i32
  }
  func.func @transform_5(%arg0: i32) -> (i32, i32) {
    %c0_i32 = arith.constant 0 : i32
    %c0_i32_0 = arith.constant 0 : i32
    %c0_i32_1 = arith.constant 0 : i32
    return %c0_i32, %c0_i32_0 : i32, i32
  }
  func.func @transform_6(%arg0: i32) -> (i32, i32) {
    %c0_i32 = arith.constant 0 : i32
    %c0_i32_0 = arith.constant 0 : i32
    %c0_i32_1 = arith.constant 0 : i32
    return %c0_i32, %c0_i32_0 : i32, i32
  }
  func.func @transform_7(%arg0: i32) -> (i32, i32) {
    %c0_i32 = arith.constant 0 : i32
    %c0_i32_0 = arith.constant 0 : i32
    return %arg0, %c0_i32 : i32, i32
  }
}

</mosaic_0001>

<llo_original>
// kernel: neural_net_forward.1
$region0: #{neural_net_forward.1}
  #allocation0 [shape = 'u32[]', space=smem, size = 0x4, offset = 0x4, fixed_abs, tag = 'smem constant byte address 0x4 - core index']
  #allocation1 [shape = 'u32[144,128]{1,0:T(1,128)}', space=vmem, size = 0x12000, scoped, tag = 'internal scratch']
  %s0 = inlined_call_operand.vmem [shape: f32[16,32], index: 0, kind: input, shape index: {}]
  %s1 = inlined_call_operand.vmem [shape: bf16[32,128], index: 1, kind: input, shape index: {}]
  %s2 = inlined_call_operand.vmem [shape: f32[1,128], index: 2, kind: input, shape index: {}]
  %s3 = inlined_call_operand.vmem [shape: bf16[128,128], index: 3, kind: input, shape index: {}]
  %s4 = inlined_call_operand.vmem [shape: f32[1,128], index: 4, kind: input, shape index: {}]
  %s5 = inlined_call_operand.vmem [shape: bf16[128,16], index: 5, kind: input, shape index: {}]
  %s6 = inlined_call_operand.vmem [shape: f32[1,16], index: 6, kind: input, shape index: {}]
  %s7 = inlined_call_operand.vmem [shape: f32[16,16], index: 7, kind: output, shape index: {}]
  %s8 = sld [smem:[#allocation0]]
  $region38: #{neural_net_forward.1} parent=0
    _
  %s10 = ssub.s32 1, %s8
  %s11 = scalar_select 0, %s10, %s8
  // Predicated region
  $region2: #{neural_net_forward.1} parent=0 // pred_check
    _
  $region3: #{neural_net_forward.1} parent=0 // pred_check_branch
    %13 = sbr.rel (0) target = $region5
  $region4: #{neural_net_forward.1} parent=0 // pred_region
    _
  $region5: #{neural_net_forward.1} parent=0 // pred_fallthru
    _
  // Predicated region
  $region6: #{neural_net_forward.1} parent=0 // pred_check
    _
  $region7: #{neural_net_forward.1} parent=0 // pred_check_branch
    %15 = sbr.rel (0) target = $region9
  $region8: #{neural_net_forward.1} parent=0 // pred_region
    _
  $region9: #{neural_net_forward.1} parent=0 // pred_fallthru
    _
  // Predicated region
  $region10: #{neural_net_forward.1} parent=0 // pred_check
    _
  $region11: #{neural_net_forward.1} parent=0 // pred_check_branch
    %17 = sbr.rel (0) target = $region13
  $region12: #{neural_net_forward.1} parent=0 // pred_region
    _
  $region13: #{neural_net_forward.1} parent=0 // pred_fallthru
    _
  // Predicated region
  $region14: #{neural_net_forward.1} parent=0 // pred_check
    _
  $region15: #{neural_net_forward.1} parent=0 // pred_check_branch
    %19 = sbr.rel (0) target = $region17
  $region16: #{neural_net_forward.1} parent=0 // pred_region
    _
  $region17: #{neural_net_forward.1} parent=0 // pred_fallthru
    _
  // Predicated region
  $region18: #{neural_net_forward.1} parent=0 // pred_check
    _
  $region19: #{neural_net_forward.1} parent=0 // pred_check_branch
    %21 = sbr.rel (0) target = $region21
  $region20: #{neural_net_forward.1} parent=0 // pred_region
    _
  $region21: #{neural_net_forward.1} parent=0 // pred_fallthru
    _
  // Predicated region
  $region22: #{neural_net_forward.1} parent=0 // pred_check
    _
  $region23: #{neural_net_forward.1} parent=0 // pred_check_branch
    %23 = sbr.rel (0) target = $region25
  $region24: #{neural_net_forward.1} parent=0 // pred_region
    _
  $region25: #{neural_net_forward.1} parent=0 // pred_fallthru
    _
  // Predicated region
  $region26: #{neural_net_forward.1} parent=0 // pred_check
    _
  $region27: #{neural_net_forward.1} parent=0 // pred_check_branch
    %25 = sbr.rel (0) target = $region29
  $region28: #{neural_net_forward.1} parent=0 // pred_region
    _
  $region29: #{neural_net_forward.1} parent=0 // pred_fallthru
    _
  %v27 = vld [vmem:[%s0] sm:$0xff]
  %v28 = vld [vmem:[%s0 + $0x8] sm:$0xff]
  %v29 = vpack.c.bf16 %v28, %v27
  %v30 = vld [vmem:[%s1] sm:$0xf]
  %v31 = vld [vmem:[%s1 + $0x4] sm:$0xf]
  %v32 = vld [vmem:[%s1 + $0x8] sm:$0xf]
  %v33 = vld [vmem:[%s1 + $0xc] sm:$0xf]
  %v34 = vld [vmem:[%s2] sm:$0x1]
  %v36 = vlaneseq
  %v37 = vshrl.u32 %v36, 7
  %v38 = vsub.s32 0, %v37
  %v39 = vrot.slane %v34, %v38
  %v45 = vunpack.c.l.b16 %v30
  %v46 = vunpack.c.l.b16 %v31
  %v47 = vunpack.c.l.b16 %v32
  %v48 = vunpack.c.l.b16 %v33
  %v49 = vpack.c.b16 %v46, %v45
  %v50 = vpack.c.b16 %v48, %v47
  %vm53 = vcmask 261120
  %v55 = vsel %vm53, %v29, 0
  %57 = vmatprep.subr.bf16.mxu0 0
  %58 = vmatpush1.bf16.msra.mxu0 0
  %59 = vmatprep.subr.bf16.mxu0 0
  %60 = vmatpush1.bf16.msra.mxu0 0
  %61 = vmatprep.subr.bf16.mxu0 0
  %62 = vmatpush1.bf16.msra.mxu0 0
  %63 = vmatprep.subr.bf16.mxu0 0
  %64 = vmatpush1.bf16.msra.mxu0 0
  %65 = vmatprep.subr.bf16.mxu0 0
  %66 = vmatpush1.bf16.msra.mxu0 0
  %67 = vmatprep.subr.bf16.mxu0 0
  %68 = vmatpush1.bf16.msra.mxu0 0
  %69 = vmatprep.subr.bf16.mxu0 0
  %70 = vmatpush1.bf16.msra.mxu0 %v50
  %71 = vmatprep.subr.bf16.mxu0 0
  %72 = vmatpush1.bf16.msra.mxu0 %v49
  %73 = vmatprep.subr.bf16.mxu0 0
  %74 = vmatpush2.bf16.msra.mxu0 0
  %75 = vmatprep.subr.bf16.mxu0 0
  %76 = vmatpush2.bf16.msra.mxu0 0
  %77 = vmatprep.subr.bf16.mxu0 0
  %78 = vmatpush2.bf16.msra.mxu0 0
  %79 = vmatprep.subr.bf16.mxu0 0
  %80 = vmatpush2.bf16.msra.mxu0 0
  %81 = vmatprep.subr.bf16.mxu0 0
  %82 = vmatpush2.bf16.msra.mxu0 0
  %83 = vmatprep.subr.bf16.mxu0 0
  %84 = vmatpush2.bf16.msra.mxu0 0
  %85 = vmatprep.subr.bf16.mxu0 0
  %86 = vmatpush2.bf16.msra.mxu0 0
  %87 = vmatprep.subr.bf16.mxu0 0
  %88 = vmatpush2.bf16.msra.mxu0 0
  %89 = vmatprep.mubr.bf16.mxu0 0
  %90 = vmatmul.mubr.bf16.gmra.mxu0 %v55
  %v91 = vpop.f32.mrf.mxu0
  %v92 = vadd.f32 %v39, %v91
  %v93 = vpop.f32.mrf.mxu0
  %v94 = vpop.f32.mrf.mxu0
  %v95 = vadd.f32 %v39, %v94
  %v96 = vpop.f32.mrf.mxu0
  %97 = vdwg.mxu0
  %v98 = vmax.f32 %v92, 0.0
  %v99 = vmax.f32 %v95, 0.0
  %v100 = vpack.c.bf16 %v99, %v98
  %v101 = vld [vmem:[%s3] sm:$0xf]
  %v102 = vld [vmem:[%s3 + $0x4] sm:$0xf]
  %v103 = vld [vmem:[%s3 + $0x8] sm:$0xf]
  %v104 = vld [vmem:[%s3 + $0xc] sm:$0xf]
  %v105 = vld [vmem:[%s3 + $0x10] sm:$0xf]
  %v106 = vld [vmem:[%s3 + $0x14] sm:$0xf]
  %v107 = vld [vmem:[%s3 + $0x18] sm:$0xf]
  %v108 = vld [vmem:[%s3 + $0x1c] sm:$0xf]
  %v109 = vld [vmem:[%s3 + $0x20] sm:$0xf]
  %v110 = vld [vmem:[%s3 + $0x24] sm:$0xf]
  %v111 = vld [vmem:[%s3 + $0x28] sm:$0xf]
  %v112 = vld [vmem:[%s3 + $0x2c] sm:$0xf]
  %v113 = vld [vmem:[%s3 + $0x30] sm:$0xf]
  %v114 = vld [vmem:[%s3 + $0x34] sm:$0xf]
  %v115 = vld [vmem:[%s3 + $0x38] sm:$0xf]
  %v116 = vld [vmem:[%s3 + $0x3c] sm:$0xf]
  %v117 = vld [vmem:[%s4] sm:$0x1]
  %v119 = vlaneseq
  %v120 = vshrl.u32 %v119, 7
  %v121 = vsub.s32 0, %v120
  %v122 = vrot.slane %v117, %v121
  %v140 = vunpack.c.l.b16 %v101
  %v141 = vunpack.c.l.b16 %v102
  %v142 = vunpack.c.l.b16 %v103
  %v143 = vunpack.c.l.b16 %v104
  %v144 = vunpack.c.l.b16 %v105
  %v145 = vunpack.c.l.b16 %v106
  %v146 = vunpack.c.l.b16 %v107
  %v147 = vunpack.c.l.b16 %v108
  %v148 = vunpack.c.l.b16 %v109
  %v149 = vunpack.c.l.b16 %v110
  %v150 = vunpack.c.l.b16 %v111
  %v151 = vunpack.c.l.b16 %v112
  %v152 = vunpack.c.l.b16 %v113
  %v153 = vunpack.c.l.b16 %v114
  %v154 = vunpack.c.l.b16 %v115
  %v155 = vunpack.c.l.b16 %v116
  %v156 = vpack.c.b16 %v141, %v140
  %v157 = vpack.c.b16 %v143, %v142
  %v158 = vpack.c.b16 %v145, %v144
  %v159 = vpack.c.b16 %v147, %v146
  %v160 = vpack.c.b16 %v149, %v148
  %v161 = vpack.c.b16 %v151, %v150
  %v162 = vpack.c.b16 %v153, %v152
  %v163 = vpack.c.b16 %v155, %v154
  %172 = vmatprep.subr.bf16.mxu0 0
  %173 = vmatpush1.bf16.msra.mxu0 %v163
  %174 = vmatprep.subr.bf16.mxu0 0
  %175 = vmatpush1.bf16.msra.mxu0 %v162
  %176 = vmatprep.subr.bf16.mxu0 0
  %177 = vmatpush1.bf16.msra.mxu0 %v161
  %178 = vmatprep.subr.bf16.mxu0 0
  %179 = vmatpush1.bf16.msra.mxu0 %v160
  %180 = vmatprep.subr.bf16.mxu0 0
  %181 = vmatpush1.bf16.msra.mxu0 %v159
  %182 = vmatprep.subr.bf16.mxu0 0
  %183 = vmatpush1.bf16.msra.mxu0 %v158
  %184 = vmatprep.subr.bf16.mxu0 0
  %185 = vmatpush1.bf16.msra.mxu0 %v157
  %186 = vmatprep.subr.bf16.mxu0 0
  %187 = vmatpush1.bf16.msra.mxu0 %v156
  %188 = vmatprep.subr.bf16.mxu0 0
  %189 = vmatpush2.bf16.msra.mxu0 0
  %190 = vmatprep.subr.bf16.mxu0 0
  %191 = vmatpush2.bf16.msra.mxu0 0
  %192 = vmatprep.subr.bf16.mxu0 0
  %193 = vmatpush2.bf16.msra.mxu0 0
  %194 = vmatprep.subr.bf16.mxu0 0
  %195 = vmatpush2.bf16.msra.mxu0 0
  %196 = vmatprep.subr.bf16.mxu0 0
  %197 = vmatpush2.bf16.msra.mxu0 0
  %198 = vmatprep.subr.bf16.mxu0 0
  %199 = vmatpush2.bf16.msra.mxu0 0
  %200 = vmatprep.subr.bf16.mxu0 0
  %201 = vmatpush2.bf16.msra.mxu0 0
  %202 = vmatprep.subr.bf16.mxu0 0
  %203 = vmatpush2.bf16.msra.mxu0 0
  %204 = vmatprep.mubr.bf16.mxu0 0
  %205 = vmatmul.mubr.bf16.gmra.mxu0 %v100
  %v206 = vpop.f32.mrf.mxu0
  %v207 = vadd.f32 %v122, %v206
  %v208 = vpop.f32.mrf.mxu0
  %v209 = vpop.f32.mrf.mxu0
  %v210 = vadd.f32 %v122, %v209
  %v211 = vpop.f32.mrf.mxu0
  %212 = vdwg.mxu0
  %v213 = vmax.f32 %v207, 0.0
  %v214 = vmax.f32 %v210, 0.0
  %v215 = vpack.c.bf16 %v214, %v213
  %v216 = vld [vmem:[%s5] sm:$0xf]
  %v217 = vld [vmem:[%s5 + $0x4] sm:$0xf]
  %v218 = vld [vmem:[%s5 + $0x8] sm:$0xf]
  %v219 = vld [vmem:[%s5 + $0xc] sm:$0xf]
  %v220 = vld [vmem:[%s5 + $0x10] sm:$0xf]
  %v221 = vld [vmem:[%s5 + $0x14] sm:$0xf]
  %v222 = vld [vmem:[%s5 + $0x18] sm:$0xf]
  %v223 = vld [vmem:[%s5 + $0x1c] sm:$0xf]
  %v224 = vld [vmem:[%s5 + $0x20] sm:$0xf]
  %v225 = vld [vmem:[%s5 + $0x24] sm:$0xf]
  %v226 = vld [vmem:[%s5 + $0x28] sm:$0xf]
  %v227 = vld [vmem:[%s5 + $0x2c] sm:$0xf]
  %v228 = vld [vmem:[%s5 + $0x30] sm:$0xf]
  %v229 = vld [vmem:[%s5 + $0x34] sm:$0xf]
  %v230 = vld [vmem:[%s5 + $0x38] sm:$0xf]
  %v231 = vld [vmem:[%s5 + $0x3c] sm:$0xf]
  %v232 = vld [vmem:[%s6] sm:$0x1]
  %v234 = vlaneseq
  %v235 = vshrl.u32 %v234, 7
  %v236 = vsub.s32 0, %v235
  %v237 = vrot.slane %v232, %v236
  %v255 = vunpack.c.l.b16 %v216
  %v256 = vunpack.c.l.b16 %v217
  %v257 = vunpack.c.l.b16 %v218
  %v258 = vunpack.c.l.b16 %v219
  %v259 = vunpack.c.l.b16 %v220
  %v260 = vunpack.c.l.b16 %v221
  %v261 = vunpack.c.l.b16 %v222
  %v262 = vunpack.c.l.b16 %v223
  %v263 = vunpack.c.l.b16 %v224
  %v264 = vunpack.c.l.b16 %v225
  %v265 = vunpack.c.l.b16 %v226
  %v266 = vunpack.c.l.b16 %v227
  %v267 = vunpack.c.l.b16 %v228
  %v268 = vunpack.c.l.b16 %v229
  %v269 = vunpack.c.l.b16 %v230
  %v270 = vunpack.c.l.b16 %v231
  %v271 = vpack.c.b16 %v256, %v255
  %v272 = vpack.c.b16 %v258, %v257
  %v273 = vpack.c.b16 %v260, %v259
  %v274 = vpack.c.b16 %v262, %v261
  %v275 = vpack.c.b16 %v264, %v263
  %v276 = vpack.c.b16 %v266, %v265
  %v277 = vpack.c.b16 %v268, %v267
  %v278 = vpack.c.b16 %v270, %v269
  %287 = vmatprep.subr.bf16.mxu0 0
  %288 = vmatpush1.bf16.msra.mxu0 %v278
  %289 = vmatprep.subr.bf16.mxu0 0
  %290 = vmatpush1.bf16.msra.mxu0 %v277
  %291 = vmatprep.subr.bf16.mxu0 0
  %292 = vmatpush1.bf16.msra.mxu0 %v276
  %293 = vmatprep.subr.bf16.mxu0 0
  %294 = vmatpush1.bf16.msra.mxu0 %v275
  %295 = vmatprep.subr.bf16.mxu0 0
  %296 = vmatpush1.bf16.msra.mxu0 %v274
  %297 = vmatprep.subr.bf16.mxu0 0
  %298 = vmatpush1.bf16.msra.mxu0 %v273
  %299 = vmatprep.subr.bf16.mxu0 0
  %300 = vmatpush1.bf16.msra.mxu0 %v272
  %301 = vmatprep.subr.bf16.mxu0 0
  %302 = vmatpush1.bf16.msra.mxu0 %v271
  %303 = vmatprep.subr.bf16.mxu0 0
  %304 = vmatpush2.bf16.msra.mxu0 0
  %305 = vmatprep.subr.bf16.mxu0 0
  %306 = vmatpush2.bf16.msra.mxu0 0
  %307 = vmatprep.subr.bf16.mxu0 0
  %308 = vmatpush2.bf16.msra.mxu0 0
  %309 = vmatprep.subr.bf16.mxu0 0
  %310 = vmatpush2.bf16.msra.mxu0 0
  %311 = vmatprep.subr.bf16.mxu0 0
  %312 = vmatpush2.bf16.msra.mxu0 0
  %313 = vmatprep.subr.bf16.mxu0 0
  %314 = vmatpush2.bf16.msra.mxu0 0
  %315 = vmatprep.subr.bf16.mxu0 0
  %316 = vmatpush2.bf16.msra.mxu0 0
  %317 = vmatprep.subr.bf16.mxu0 0
  %318 = vmatpush2.bf16.msra.mxu0 0
  %319 = vmatprep.mubr.bf16.mxu0 0
  %320 = vmatmul.mubr.bf16.gmra.mxu0 %v215
  %v321 = vpop.f32.mrf.mxu0
  %v322 = vadd.f32 %v237, %v321
  %v323 = vpop.f32.mrf.mxu0
  %v324 = vpop.f32.mrf.mxu0
  %v325 = vadd.f32 %v237, %v324
  %v326 = vpop.f32.mrf.mxu0
  %327 = vdwg.mxu0
  %vm328 = vcmask 130048
  %329 = vst.msk [vmem:[%s7] sm:$0xff] %vm328, %v322
  %330 = vst.msk [vmem:[%s7 + $0x8] sm:$0xff] %vm328, %v325
  // Predicated region
  $region30: #{neural_net_forward.1} parent=0 // pred_check
    _
  $region31: #{neural_net_forward.1} parent=0 // pred_check_branch
    %332 = sbr.rel (0) target = $region33
  $region32: #{neural_net_forward.1} parent=0 // pred_region
    _
  $region33: #{neural_net_forward.1} parent=0 // pred_fallthru
    _
  // Predicated region
  $region34: #{neural_net_forward.1} parent=0 // pred_check
    _
  $region35: #{neural_net_forward.1} parent=0 // pred_check_branch
    %334 = sbr.rel (0) target = $region37
  $region36: #{neural_net_forward.1} parent=0 // pred_region
    _
  $region37: #{neural_net_forward.1} parent=0 // pred_fallthru
    _

</llo_original>
